<compile_context>
chip_gen: v5e
topology: v5e:2x2
jax: 0.10.0
libtpu: 0.0.40
codegen_flags: <defaults>
</compile_context>

<pallas_src>
import functools

import numpy as np
import jax
import jax.numpy as jnp
from jax import lax
from jax.experimental import pallas as pl
from jax.experimental.pallas import tpu as pltpu

MODES = ('sgdet', 'sgcls', 'predcls')


def _round_up(x: int, m: int) -> int:
    return ((x + m - 1) // m) * m


def _next_pow2(x: int) -> int:
    x = max(int(x), 1)
    return 1 << (x - 1).bit_length()


@functools.lru_cache(maxsize=1)
def _vmem_limit_bytes() -> int:
    """Generation-aware scoped-VMEM limit (64 MiB on 128-MiB parts, 48 MiB on v7x)."""
    mib = 1024 * 1024
    limit = 48 * mib
    try:
        cap = getattr(pltpu.get_tpu_info(), "vmem_capacity_bytes", None)
        if cap:
            limit = int(min(64 * mib, max(32 * mib, int(cap) - 16 * mib)))
    except Exception:
        pass
    return limit


# ----------------------------------------------------------------------------
# Pallas kernel: pairwise relation-candidate mask + per-row counts (tiled)
# ----------------------------------------------------------------------------
def _rel_cands_kernel(*refs, require_overlap: bool, tm: int, tn: int):
    if require_overlap:
        im_r_ref, im_c_ref, box_r_ref, box_c_ref, mask_ref, cnt_ref = refs
    else:
        im_r_ref, im_c_ref, mask_ref, cnt_ref = refs
        box_r_ref = box_c_ref = None

    i = pl.program_id(0)
    j = pl.program_id(1)
    row0 = i * tm
    col0 = j * tn

    # Column data is pinned VMEM-resident (constant index_map, DMA'd once);
    # grab this step's tn-wide window by dynamic first-axis indexing.
    im_c = im_c_ref[j]                                          # (1, tn) int32

    # Same-image candidates ...
    cand = im_r_ref[...] == im_c                                # (tm, tn) bool
    # ... excluding self-relations.  Small (tm,1)/(1,tn) iotas + one broadcast
    # compare per element; done unconditionally so no tile-sized value has to
    # live across an scf.if boundary.
    ri = row0 + lax.broadcasted_iota(jnp.int32, (tm, 1), 0)
    ci = col0 + lax.broadcasted_iota(jnp.int32, (1, tn), 1)
    cand = jnp.logical_and(cand, ri != ci)

    if require_overlap:
        # bbox_overlaps(box_priors, box_priors) > 0  <=>  intersection area > 0.
        x1r = box_r_ref[:, 0:1]
        y1r = box_r_ref[:, 1:2]
        x2r = box_r_ref[:, 2:3]
        y2r = box_r_ref[:, 3:4]
        bc = box_c_ref[j]                                       # (4, tn) float32
        iw = jnp.minimum(x2r, bc[2:3, :]) - jnp.maximum(x1r, bc[0:1, :]) + 1.0
        cand = jnp.logical_and(cand, iw > 0.0)
        ih = jnp.minimum(y2r, bc[3:4, :]) - jnp.maximum(y1r, bc[1:2, :]) + 1.0
        cand = jnp.logical_and(cand, ih > 0.0)

    mask_ref[...] = cand.astype(jnp.int8)

    # Per-row candidate counts.  Columns >= N were padded host-side with an
    # impossible image index (-1), so padded lanes never count; rows >= N are
    # dropped by the partial output writeback.  Lane-aligned 128-wide group
    # sums keep this on the VPU with only a tiny final cross-lane reduce.
    acc = jnp.zeros((tm, 128), jnp.int32)
    for g in range(tn // 128):
        acc = acc + cand[:, g * 128:(g + 1) * 128].astype(jnp.int32)
    row_cnt = jnp.sum(acc, axis=1, keepdims=True)               # (tm, 1) int32

    @pl.when(j == 0)
    def _init():
        cnt_ref[...] = row_cnt

    @pl.when(j != 0)
    def _accum():
        cnt_ref[...] = cnt_ref[...] + row_cnt


def rel_candidate_mask(im_inds, box_priors, require_overlap: bool, *, tm=None, tn=None):
    """Pairwise (subject, object) relation-candidate mask.

    Returns:
      mask:       (N, N) int8   -- 1 where (row, col) is a valid candidate pair.
      row_counts: (N, 1) int32  -- per-row number of candidates (sum == K).
    """
    im_flat = jnp.asarray(im_inds).reshape(-1).astype(jnp.int32)
    n = int(im_flat.shape[0])

    # Tile selection: lane-dense tn (multiple of 128), tm a multiple of 32 so
    # int8 output stores are unmasked packed vregs (8 only for tiny N).
    if tn is None:
        tn = 2048 if require_overlap else 4096
    if tm is None:
        tm = 512
    tn = int(max(128, min(_round_up(int(tn), 128), _round_up(n, 128))))
    row_mult = 32 if n >= 32 else 8
    tm = int(max(row_mult, min(_round_up(int(tm), row_mult), _round_up(n, row_mult))))

    grid = (pl.cdiv(n, tm), pl.cdiv(n, tn))
    gc = grid[1]
    wc = gc * tn                       # padded column extent for resident inputs

    im_r = im_flat.reshape(n, 1)
    # Column image ids: padded with a sentinel (-1) that can never match a real
    # image index, reshaped to (gc, 1, tn) and pinned in VMEM once.
    im_cols = jnp.pad(im_flat, (0, wc - n), constant_values=-1).reshape(gc, 1, tn)

    in_specs = [
        pl.BlockSpec((tm, 1), lambda i, j: (i, 0)),          # row ids (re-DMA on i only)
        pl.BlockSpec((gc, 1, tn), lambda i, j: (0, 0, 0)),   # column ids: VMEM resident
    ]
    args = [im_r, im_cols]

    if require_overlap:
        boxes = jnp.asarray(box_priors).astype(jnp.float32).reshape(n, 4)
        box_cols = jnp.pad(boxes.T, ((0, 0), (0, wc - n)))              # (4, wc)
        box_cols = box_cols.reshape(4, gc, tn).transpose(1, 0, 2)       # (gc, 4, tn)
        in_specs += [
            pl.BlockSpec((tm, 4), lambda i, j: (i, 0)),                 # row boxes
            pl.BlockSpec((gc, 4, tn), lambda i, j: (0, 0, 0)),          # column boxes: resident
        ]
        args += [boxes, box_cols]

    kernel = functools.partial(_rel_cands_kernel,
                               require_overlap=require_overlap, tm=tm, tn=tn)

    mask, row_counts = pl.pallas_call(
        kernel,
        out_shape=(jax.ShapeDtypeStruct((n, n), jnp.int8),
                   jax.ShapeDtypeStruct((n, 1), jnp.int32)),
        grid=grid,
        in_specs=in_specs,
        out_specs=(pl.BlockSpec((tm, tn), lambda i, j: (i, j)),
                   pl.BlockSpec((tm, 1), lambda i, j: (i, 0))),
        compiler_params=pltpu.CompilerParams(
            # Row axis shards across TensorCores (megacore); the column axis is
            # "arbitrary" because the per-row count block is revisited across j.
            dimension_semantics=("parallel", "arbitrary"),
            vmem_limit_bytes=_vmem_limit_bytes(),
        ),
    )(*args)
    return mask, row_counts


# ----------------------------------------------------------------------------
# Pure-numpy reference (for in-script correctness checking)
# ----------------------------------------------------------------------------
def _ref_mask(im_inds, boxes, require_overlap):
    im = np.asarray(im_inds)
    n = im.shape[0]
    m = (im[:, None] == im[None, :])
    m[np.arange(n), np.arange(n)] = False
    if require_overlap:
        b = np.asarray(boxes, dtype=np.float32)
        iw = (np.minimum(b[:, None, 2], b[None, :, 2])
              - np.maximum(b[:, None, 0], b[None, :, 0]) + np.float32(1.0))
        ih = (np.minimum(b[:, None, 3], b[None, :, 3])
              - np.maximum(b[:, None, 1], b[None, :, 1]) + np.float32(1.0))
        m = m & (iw > 0) & (ih > 0)
    return m.astype(np.int8)


# ----------------------------------------------------------------------------
# JAX/Pallas port of RelModelBase
# ----------------------------------------------------------------------------
class RelModelBase:
    """RELATIONSHIPS (Pallas port of the computable parts)."""

    def __init__(self, train_data, mode='sgdet', num_gpus=1,
                 require_overlap_det=True, use_bias=False, test_bias=False,
                 detector_model='baseline', RELS_PER_IMG=1024):
        self.classes = train_data.ind_to_classes
        self.rel_classes = train_data.ind_to_predicates
        self.num_gpus = num_gpus
        assert mode in MODES
        self.mode = mode
        self.detector_model = detector_model
        self.RELS_PER_IMG = RELS_PER_IMG
        self.pooling_size = 7
        self.stride = 16
        self.obj_dim = 4096
        self.use_bias = use_bias
        self.test_bias = test_bias
        self.require_overlap = require_overlap_det and self.mode == 'sgdet'
        self.training = False
        # TODO(synk): the torchvision maskrcnn_resnet50_fpn detector, the
        # UnionBoxesAndFeats module and the deep-copied roi_fmap / roi-pool
        # heads are external pretrained networks whose weights/definitions are
        # not part of this file; they have no self-contained Pallas equivalent.
        # TODO(synk): FrequencyBias (use_bias=True) depends on dataset
        # co-occurrence statistics held in train_data; omitted (use_bias=False).

    @property
    def num_classes(self):
        return len(self.classes)

    @property
    def num_rels(self):
        return len(self.rel_classes)

    def get_rel_inds(self, rel_labels, im_inds, box_priors):
        if self.training:
            return np.asarray(rel_labels)[:, :3].copy()
        # Hot path: pairwise candidate mask + per-row counts from the kernel.
        mask, row_counts = rel_candidate_mask(im_inds, box_priors, self.require_overlap)
        n = int(mask.shape[0])
        # One scalar device->host sync; the dense NxN mask is NOT re-read for
        # counting (the kernel already folded the reduction).
        count = int(jnp.sum(row_counts))
        im_dev = jnp.asarray(im_inds).reshape(-1).astype(jnp.int32)
        if count == 0:
            rel_cands = jnp.zeros((1, 2), dtype=jnp.int32)
            keep = 1
        else:
            # Bucketed static size -> only O(log N^2) distinct compilations of
            # nonzero instead of one per candidate count; padded tail trimmed below.
            size = int(min(n * n, _next_pow2(count)))
            rows, cols = jnp.nonzero(mask, size=size, fill_value=0)
            rel_cands = jnp.stack(
                [rows.astype(jnp.int32), cols.astype(jnp.int32)], axis=1)
            keep = count
        rel_inds = jnp.concatenate(
            [im_dev[rel_cands[:, 0]][:, None], rel_cands], axis=1)  # (size, 3)
        return np.asarray(jax.block_until_ready(rel_inds))[:keep]

    def predict(self, node_feat, edge_feat, rel_inds, rois, im_sizes):
        raise NotImplementedError('predict')

    def forward(self, x, im_sizes, image_offset, gt_boxes=None, gt_classes=None,
                gt_rels=None, *arg):
        # TODO(synk): reference forward() raises NotImplementedError as well.
        raise NotImplementedError('forward')


# ----------------------------------------------------------------------------
# Demo / self-check
# ----------------------------------------------------------------------------
class _TrainData:
    ind_to_classes = ['__background__', 'person', 'dog', 'chair']
    ind_to_predicates = ['__no_rel__', 'on', 'near']


if __name__ == "__main__":
    key = jax.random.PRNGKey(0)
    k1, k2, k3, k4, k5 = jax.random.split(key, 5)

    # --- tiny end-to-end demo through the module ---------------------------
    n_boxes = 8
    im_inds = jnp.array([0, 0, 0, 0, 1, 1, 1, 1], dtype=jnp.int32)   # 2 images x 4 proposals
    xy1 = jax.random.uniform(k1, (n_boxes, 2), minval=0.0, maxval=50.0)
    wh = jax.random.uniform(k2, (n_boxes, 2), minval=10.0, maxval=40.0)
    box_priors = jnp.concatenate([xy1, xy1 + wh], axis=1).astype(jnp.float32)

    model = RelModelBase(_TrainData(), mode='sgdet', require_overlap_det=True)
    model.training = False

    rel_inds = model.get_rel_inds(None, im_inds, box_priors)
    ref_small = _ref_mask(im_inds, box_priors, True)
    rr, cc = np.nonzero(ref_small)
    im_np = np.asarray(im_inds)
    if rr.size > 0:
        expected = np.stack([im_np[rr], rr, cc], axis=1)
    else:
        expected = np.array([[int(im_np[0]), 0, 0]])
    np.testing.assert_array_equal(np.asarray(rel_inds), expected)

    mask_s, cnt_s = jax.block_until_ready(
        rel_candidate_mask(im_inds, box_priors, True))
    np.testing.assert_array_equal(np.asarray(mask_s), ref_small)
    np.testing.assert_array_equal(np.asarray(cnt_s)[:, 0], ref_small.sum(axis=1))

    # --- multi-tile grid check: N not a multiple of the tile sizes, partial
    #     boundary tiles, diagonal + count accumulation across several tiles --
    n2 = 200
    im_inds2 = (jax.random.uniform(k3, (n2,)) * 3.0).astype(jnp.int32)
    xy1b = jax.random.uniform(k4, (n2, 2), minval=0.0, maxval=200.0)
    whb = jax.random.uniform(k5, (n2, 2), minval=5.0, maxval=80.0)
    boxes2 = jnp.concatenate([xy1b, xy1b + whb], axis=1).astype(jnp.float32)

    ref_ov = _ref_mask(im_inds2, boxes2, True)
    m_ov, c_ov = jax.block_until_ready(
        rel_candidate_mask(im_inds2, boxes2, True, tm=64, tn=128))
    np.testing.assert_array_equal(np.asarray(m_ov), ref_ov)
    np.testing.assert_array_equal(np.asarray(c_ov)[:, 0], ref_ov.sum(axis=1))

    m_ov2, c_ov2 = jax.block_until_ready(
        rel_candidate_mask(im_inds2, boxes2, True))            # default tiles
    np.testing.assert_array_equal(np.asarray(m_ov2), ref_ov)
    np.testing.assert_array_equal(np.asarray(c_ov2)[:, 0], ref_ov.sum(axis=1))

    ref_no = _ref_mask(im_inds2, None, False)
    m_no, c_no = jax.block_until_ready(
        rel_candidate_mask(im_inds2, None, False, tm=64, tn=128))
    np.testing.assert_array_equal(np.asarray(m_no), ref_no)
    np.testing.assert_array_equal(np.asarray(c_no)[:, 0], ref_no.sum(axis=1))

    print("KERNEL_OK")
</pallas_src>

<mosaic_0001>
module attributes {stable_mosaic.version = 11 : i64} {
  func.func @_rel_cands_kernel(%arg0: i32, %arg1: i32, %arg2: memref<8x1xi32, #tpu.memory_space<vmem>>, %arg3: memref<1x1x128xi32, #tpu.memory_space<vmem>>, %arg4: memref<8x4xf32, #tpu.memory_space<vmem>>, %arg5: memref<1x4x128xf32, #tpu.memory_space<vmem>>, %arg6: memref<8x128xi8, #tpu.memory_space<vmem>>, %arg7: memref<8x1xi32, #tpu.memory_space<vmem>>) attributes {dimension_semantics = [#tpu.dimension_semantics<parallel>, #tpu.dimension_semantics<arbitrary>], iteration_bounds = array<i64: 1, 1>, scalar_prefetch = 0 : i64, scratch_operands = 0 : i64, tpu.core_type = #tpu.core_type<tc>, window_params = [{transform_indices = @transform_0, window_bounds = array<i64: 8, 1>}, {pipeline_mode = #tpu.pipeline_mode<synchronous>, transform_indices = @transform_1, window_bounds = array<i64: 1, 1, 128>}, {transform_indices = @transform_2, window_bounds = array<i64: 8, 4>}, {pipeline_mode = #tpu.pipeline_mode<synchronous>, transform_indices = @transform_3, window_bounds = array<i64: 1, 4, 128>}, {transform_indices = @transform_4, window_bounds = array<i64: 8, 128>}, {transform_indices = @transform_5, window_bounds = array<i64: 8, 1>}]} {
    %c8_i32 = arith.constant 8 : i32
    %0 = arith.muli %arg0, %c8_i32 : i32
    %c128_i32 = arith.constant 128 : i32
    %1 = arith.muli %arg1, %c128_i32 : i32
    %2 = arith.index_cast %arg1 : i32 to index
    %c0 = arith.constant 0 : index
    %c0_0 = arith.constant 0 : index
    %3 = vector.load %arg3[%2, %c0, %c0_0] : memref<1x1x128xi32, #tpu.memory_space<vmem>>, vector<1x1x128xi32>
    %4 = vector.shape_cast %3 : vector<1x1x128xi32> to vector<1x128xi32>
    %c0_1 = arith.constant 0 : index
    %c0_2 = arith.constant 0 : index
    %5 = vector.load %arg2[%c0_1, %c0_2] : memref<8x1xi32, #tpu.memory_space<vmem>>, vector<8x1xi32>
    %6 = vector.broadcast %5 : vector<8x1xi32> to vector<8x128xi32>
    %7 = vector.broadcast %4 : vector<1x128xi32> to vector<8x128xi32>
    %8 = arith.cmpi eq, %6, %7 : vector<8x128xi32>
    %9 = tpu.iota {dimensions = array<i32: 0>} : vector<8x1xi32>
    %10 = vector.broadcast %0 : i32 to vector<8x1xi32>
    %11 = arith.addi %10, %9 : vector<8x1xi32>
    %12 = tpu.iota {dimensions = array<i32: 1>} : vector<1x128xi32>
    %13 = vector.broadcast %1 : i32 to vector<1x128xi32>
    %14 = arith.addi %13, %12 : vector<1x128xi32>
    %15 = vector.broadcast %11 : vector<8x1xi32> to vector<8x128xi32>
    %16 = vector.broadcast %14 : vector<1x128xi32> to vector<8x128xi32>
    %17 = arith.cmpi ne, %15, %16 : vector<8x128xi32>
    %18 = arith.andi %8, %17 : vector<8x128xi1>
    %c0_3 = arith.constant 0 : index
    %c0_4 = arith.constant 0 : index
    %19 = vector.load %arg4[%c0_3, %c0_4] : memref<8x4xf32, #tpu.memory_space<vmem>>, vector<8x1xf32>
    %c0_5 = arith.constant 0 : index
    %c1 = arith.constant 1 : index
    %20 = vector.load %arg4[%c0_5, %c1] : memref<8x4xf32, #tpu.memory_space<vmem>>, vector<8x1xf32>
    %c0_6 = arith.constant 0 : index
    %c2 = arith.constant 2 : index
    %21 = vector.load %arg4[%c0_6, %c2] : memref<8x4xf32, #tpu.memory_space<vmem>>, vector<8x1xf32>
    %c0_7 = arith.constant 0 : index
    %c3 = arith.constant 3 : index
    %22 = vector.load %arg4[%c0_7, %c3] : memref<8x4xf32, #tpu.memory_space<vmem>>, vector<8x1xf32>
    %23 = arith.index_cast %arg1 : i32 to index
    %c0_8 = arith.constant 0 : index
    %c0_9 = arith.constant 0 : index
    %24 = vector.load %arg5[%23, %c0_8, %c0_9] : memref<1x4x128xf32, #tpu.memory_space<vmem>>, vector<1x4x128xf32>
    %25 = vector.shape_cast %24 : vector<1x4x128xf32> to vector<4x128xf32>
    %26 = vector.extract_strided_slice %25 {offsets = [2, 0], sizes = [1, 128], strides = [1, 1]} : vector<4x128xf32> to vector<1x128xf32>
    %27 = vector.broadcast %21 : vector<8x1xf32> to vector<8x128xf32>
    %28 = vector.broadcast %26 : vector<1x128xf32> to vector<8x128xf32>
    %29 = arith.minimumf %27, %28 : vector<8x128xf32>
    %30 = vector.extract_strided_slice %25 {offsets = [0, 0], sizes = [1, 128], strides = [1, 1]} : vector<4x128xf32> to vector<1x128xf32>
    %31 = vector.broadcast %19 : vector<8x1xf32> to vector<8x128xf32>
    %32 = vector.broadcast %30 : vector<1x128xf32> to vector<8x128xf32>
    %33 = arith.maximumf %31, %32 : vector<8x128xf32>
    %34 = arith.subf %29, %33 : vector<8x128xf32>
    %cst = arith.constant 1.000000e+00 : f32
    %35 = vector.broadcast %cst : f32 to vector<8x128xf32>
    %36 = arith.addf %34, %35 : vector<8x128xf32>
    %cst_10 = arith.constant 0.000000e+00 : f32
    %37 = vector.broadcast %cst_10 : f32 to vector<8x128xf32>
    %38 = arith.cmpf ogt, %36, %37 : vector<8x128xf32>
    %39 = arith.andi %18, %38 : vector<8x128xi1>
    %40 = vector.extract_strided_slice %25 {offsets = [3, 0], sizes = [1, 128], strides = [1, 1]} : vector<4x128xf32> to vector<1x128xf32>
    %41 = vector.broadcast %22 : vector<8x1xf32> to vector<8x128xf32>
    %42 = vector.broadcast %40 : vector<1x128xf32> to vector<8x128xf32>
    %43 = arith.minimumf %41, %42 : vector<8x128xf32>
    %44 = vector.extract_strided_slice %25 {offsets = [1, 0], sizes = [1, 128], strides = [1, 1]} : vector<4x128xf32> to vector<1x128xf32>
    %45 = vector.broadcast %20 : vector<8x1xf32> to vector<8x128xf32>
    %46 = vector.broadcast %44 : vector<1x128xf32> to vector<8x128xf32>
    %47 = arith.maximumf %45, %46 : vector<8x128xf32>
    %48 = arith.subf %43, %47 : vector<8x128xf32>
    %cst_11 = arith.constant 1.000000e+00 : f32
    %49 = vector.broadcast %cst_11 : f32 to vector<8x128xf32>
    %50 = arith.addf %48, %49 : vector<8x128xf32>
    %cst_12 = arith.constant 0.000000e+00 : f32
    %51 = vector.broadcast %cst_12 : f32 to vector<8x128xf32>
    %52 = arith.cmpf ogt, %50, %51 : vector<8x128xf32>
    %53 = arith.andi %39, %52 : vector<8x128xi1>
    %54 = arith.extui %53 : vector<8x128xi1> to vector<8x128xi8>
    %c0_13 = arith.constant 0 : index
    %c0_14 = arith.constant 0 : index
    %55 = vector.load %arg6[%c0_13, %c0_14] : memref<8x128xi8, #tpu.memory_space<vmem>>, vector<8x128xi8>
    tpu.vector_store %arg6[%c0_13, %c0_14], %54 {strides = array<i32>} : memref<8x128xi8, #tpu.memory_space<vmem>>, vector<8x128xi8>,
    %c0_i32 = arith.constant 0 : i32
    %56 = vector.broadcast %c0_i32 : i32 to vector<8x128xi32>
    %57 = arith.extui %53 : vector<8x128xi1> to vector<8x128xi32>
    %58 = arith.addi %56, %57 : vector<8x128xi32>
    %cst_15 = arith.constant dense<0> : vector<8xi32>
    %59 = vector.multi_reduction <add>, %58, %cst_15 [1] : vector<8x128xi32> to vector<8xi32>
    %60 = vector.shape_cast %59 : vector<8xi32> to vector<8x1xi32>
    %c0_i32_16 = arith.constant 0 : i32
    %61 = arith.cmpi eq, %arg1, %c0_i32_16 : i32
    %62 = arith.extui %61 : i1 to i32
    %c0_i32_17 = arith.constant 0 : i32
    %63 = arith.cmpi ne, %62, %c0_i32_17 : i32
    scf.if %63 {
      %c0_20 = arith.constant 0 : index
      %c0_21 = arith.constant 0 : index
      %67 = vector.load %arg7[%c0_20, %c0_21] : memref<8x1xi32, #tpu.memory_space<vmem>>, vector<8x1xi32>
      tpu.vector_store %arg7[%c0_20, %c0_21], %60 {strides = array<i32>} : memref<8x1xi32, #tpu.memory_space<vmem>>, vector<8x1xi32>,
    } else {
    }
    %c0_i32_18 = arith.constant 0 : i32
    %64 = arith.cmpi ne, %arg1, %c0_i32_18 : i32
    %65 = arith.extui %64 : i1 to i32
    %c0_i32_19 = arith.constant 0 : i32
    %66 = arith.cmpi ne, %65, %c0_i32_19 : i32
    scf.if %66 {
      %c0_20 = arith.constant 0 : index
      %c0_21 = arith.constant 0 : index
      %67 = vector.load %arg7[%c0_20, %c0_21] : memref<8x1xi32, #tpu.memory_space<vmem>>, vector<8x1xi32>
      %68 = arith.addi %67, %60 : vector<8x1xi32>
      %c0_22 = arith.constant 0 : index
      %c0_23 = arith.constant 0 : index
      %69 = vector.load %arg7[%c0_22, %c0_23] : memref<8x1xi32, #tpu.memory_space<vmem>>, vector<8x1xi32>
      tpu.vector_store %arg7[%c0_22, %c0_23], %68 {strides = array<i32>} : memref<8x1xi32, #tpu.memory_space<vmem>>, vector<8x1xi32>,
    } else {
    }
    return
  }
  func.func @transform_0(%arg0: i32, %arg1: i32) -> (i32, i32) {
    %c0_i32 = arith.constant 0 : i32
    %c0_i32_0 = arith.constant 0 : i32
    return %arg0, %c0_i32 : i32, i32
  }
  func.func @transform_1(%arg0: i32, %arg1: i32) -> (i32, i32, i32) {
    %c0_i32 = arith.constant 0 : i32
    %c0_i32_0 = arith.constant 0 : i32
    %c0_i32_1 = arith.constant 0 : i32
    %c0_i32_2 = arith.constant 0 : i32
    return %c0_i32, %c0_i32_0, %c0_i32_1 : i32, i32, i32
  }
  func.func @transform_2(%arg0: i32, %arg1: i32) -> (i32, i32) {
    %c0_i32 = arith.constant 0 : i32
    %c0_i32_0 = arith.constant 0 : i32
    return %arg0, %c0_i32 : i32, i32
  }
  func.func @transform_3(%arg0: i32, %arg1: i32) -> (i32, i32, i32) {
    %c0_i32 = arith.constant 0 : i32
    %c0_i32_0 = arith.constant 0 : i32
    %c0_i32_1 = arith.constant 0 : i32
    %c0_i32_2 = arith.constant 0 : i32
    return %c0_i32, %c0_i32_0, %c0_i32_1 : i32, i32, i32
  }
  func.func @transform_4(%arg0: i32, %arg1: i32) -> (i32, i32) {
    %c0_i32 = arith.constant 0 : i32
    return %arg0, %arg1 : i32, i32
  }
  func.func @transform_5(%arg0: i32, %arg1: i32) -> (i32, i32) {
    %c0_i32 = arith.constant 0 : i32
    %c0_i32_0 = arith.constant 0 : i32
    return %arg0, %c0_i32 : i32, i32
  }
}

</mosaic_0001>

<llo_original>
// kernel: tpu_custom_call.1
$region0: #{tpu_custom_call.1}
  #allocation0 [shape = 'u32[]', space=smem, size = 0x4, offset = 0x4, fixed_abs, tag = 'smem constant byte address 0x4 - core index']
  #allocation1 [shape = 'u32[72,128]{1,0:T(1,128)}', space=vmem, size = 0x9000, scoped, tag = 'internal scratch']
  %s0 = inlined_call_operand.vmem [shape: s32[8,1], index: 0, kind: input, shape index: {}]
  %s1 = inlined_call_operand.vmem [shape: s32[1,1,128], index: 1, kind: input, shape index: {}]
  %s2 = inlined_call_operand.vmem [shape: f32[8,4], index: 2, kind: input, shape index: {}]
  %s3 = inlined_call_operand.vmem [shape: f32[1,4,128], index: 3, kind: input, shape index: {}]
  %s4 = inlined_call_operand.hbm [shape: s8[8,8], index: 4, kind: output, shape index: {0}]
  %s5 = inlined_call_operand.vmem [shape: s32[8,1], index: 5, kind: output, shape index: {1}]
  %6 = xla_tuple %s4, %s5
  %s7 = sld [smem:[#allocation0]]
  $region42: #{tpu_custom_call.1} parent=0
    _
  %s9 = ssub.s32 1, %s7
  %s10 = scalar_select 0, %s9, %s7
  $region1: #{tpu_custom_call.1} parent=0
    #allocation2 [shape = 'u8[1024]{0}', space=vmem, size = 0x400, scoped, tag = 'output window, operand 0, single buffered']
    #allocation3 [shape = 's32[1]{0}', space=sflag, size = 0x4, scoped, tag = 'scoped memory for tpu_custom_call.1']
    %11 = vsyncpa [#allocation3], 0
    // Predicated region
    $region2: #{tpu_custom_call.1} parent=1 // pred_check
      _
    $region3: #{tpu_custom_call.1} parent=1 // pred_check_branch
      %13 = sbr.rel (0) target = $region5
    $region4: #{tpu_custom_call.1} parent=1 // pred_region
      _
    $region5: #{tpu_custom_call.1} parent=1 // pred_fallthru
      _
    // Predicated region
    $region6: #{tpu_custom_call.1} parent=1 // pred_check
      _
    $region7: #{tpu_custom_call.1} parent=1 // pred_check_branch
      %15 = sbr.rel (0) target = $region9
    $region8: #{tpu_custom_call.1} parent=1 // pred_region
      _
    $region9: #{tpu_custom_call.1} parent=1 // pred_fallthru
      _
    // Predicated region
    $region10: #{tpu_custom_call.1} parent=1 // pred_check
      _
    $region11: #{tpu_custom_call.1} parent=1 // pred_check_branch
      %17 = sbr.rel (0) target = $region13
    $region12: #{tpu_custom_call.1} parent=1 // pred_region
      _
    $region13: #{tpu_custom_call.1} parent=1 // pred_fallthru
      _
    // Predicated region
    $region14: #{tpu_custom_call.1} parent=1 // pred_check
      _
    $region15: #{tpu_custom_call.1} parent=1 // pred_check_branch
      %19 = sbr.rel (0) target = $region17
    $region16: #{tpu_custom_call.1} parent=1 // pred_region
      _
    $region17: #{tpu_custom_call.1} parent=1 // pred_fallthru
      _
    %s22 = smul.u32 0, 8
    %s23 = smul.u32 0, 128
    %v24 = vld [vmem:[%s1] sm:$0x1]
    %v25 = vld [vmem:[%s0] sm:$0xff]
    %26 = vset.pattern.permute.xlu0 0
    %27 = vperm.xlu0 %26, %v25
    %v28 = vpop.permute.xlu0 %27
    %v29 = vperm.slane %v24, 0
    %vm30 = vcmp.eq.s32.totalorder %v28, %v29
    %v31 = vlaneseq
    %v32 = vshrl.u32 %v31, 7
    %v33 = vstv %s22
    %v34 = vadd.s32 %v33, %v32
    %v35 = vlaneseq
    %v36 = vand.u32 %v35, 127
    %v37 = vstv %s23
    %v38 = vadd.s32 %v37, %v36
    %vm39 = vcmp.ne.s32.totalorder %v34, %v38
    %vm40 = vmand %vm30, %vm39
    %v41 = vld [vmem:[%s2] sm:$0xff]
    %s42 = smul.u32 0, 4
    %s43 = scalar_lea.vmem %s3, %s42
    %v44 = vld [vmem:[%s43] sm:$0xf]
    %46 = vset.pattern.permute.xlu0 2
    %47 = vperm.xlu0 %46, %v41
    %v48 = vpop.permute.xlu0 %47
    %v50 = vperm.slane %v44, 2
    %v51 = vmin.f32 %v48, %v50
    %52 = vset.pattern.permute.xlu0 0
    %53 = vperm.xlu0 %52, %v41
    %v54 = vpop.permute.xlu0 %53
    %v56 = vperm.slane %v44, 0
    %v57 = vmax.f32 %v54, %v56
    %v58 = vsub.f32 %v51, %v57
    %v59 = vadd.f32 %v58, 1.0
    %vm60 = vcmp.gt.f32.partialorder %v59, 0.0
    %vm61 = vmand %vm40, %vm60
    %62 = vset.pattern.permute.xlu0 3
    %63 = vperm.xlu0 %62, %v41
    %v64 = vpop.permute.xlu0 %63
    %v66 = vperm.slane %v44, 3
    %v67 = vmin.f32 %v64, %v66
    %68 = vset.pattern.permute.xlu0 1
    %69 = vperm.xlu0 %68, %v41
    %v70 = vpop.permute.xlu0 %69
    %v72 = vperm.slane %v44, 1
    %v73 = vmax.f32 %v70, %v72
    %v74 = vsub.f32 %v67, %v73
    %v75 = vadd.f32 %v74, 1.0
    %vm76 = vcmp.gt.f32.partialorder %v75, 0.0
    %vm77 = vmand %vm61, %vm76
    %vm78 = vmpackc.low %vm77, %vm77
    %v79 = vsel %vm78, 16711935, 0
    %v80 = vsel %vm78, 16711935, 0
    %v81 = vpack.c.b8 %v80, %v79
    %vm82 = vnez %v81
    %v83 = vsel %vm82, 16843009, 0
    %84 = vst [vmem:[#allocation2] sm:$0x3] %v83
    %v85 = vsel %vm77, 1, 0
    %v86 = vand.u32 %v85, 65535
    %v87 = vshrl.u32 %v85, 16
    %v88 = vcvt.s32.f32 %v86
    %v89 = vcvt.s32.f32 %v87
    %90 = vadd.xlane.f32.xlu0 %v88
    %v91 = vpop.xlane.xlu0 %90
    %92 = vadd.xlane.f32.xlu0 %v89
    %v93 = vpop.xlane.xlu0 %92
    %v94 = vcvt.f32.s32 %v91
    %v95 = vcvt.f32.s32 %v93
    %v96 = vshll.u32 %v95, 16
    %v97 = vadd.s32 %v96, %v94
    %p98 = scmp.eq.s32.totalorder 0, 0
    // Predicated region
    $region18: #{tpu_custom_call.1} parent=1 // pred_check
      %p99 = pneg %p98
    $region19: #{tpu_custom_call.1} parent=1 // pred_check_branch
      %101 = sbr.rel (%p99) target = $region21
    $region20: #{tpu_custom_call.1} parent=1 // pred_region
      %vm102 = vcmask 7168
      %103 = vst.msk [vmem:[%s5] sm:$0xff] %vm102, %v97
    $region21: #{tpu_custom_call.1} parent=1 // pred_fallthru
      _
    %p104 = scmp.ne.s32.totalorder 0, 0
    // Predicated region
    $region22: #{tpu_custom_call.1} parent=1 // pred_check
      %p105 = pneg %p104
    $region23: #{tpu_custom_call.1} parent=1 // pred_check_branch
      %107 = sbr.rel (%p105) target = $region25
    $region24: #{tpu_custom_call.1} parent=1 // pred_region
      %v108 = vld [vmem:[%s5] sm:$0xff]
      %v109 = vadd.s32 %v108, %v97
      %vm110 = vcmask 7168
      %111 = vst.msk [vmem:[%s5] sm:$0xff] %vm110, %v109
    $region25: #{tpu_custom_call.1} parent=1 // pred_fallthru
      _
    // Predicated region
    $region26: #{tpu_custom_call.1} parent=1 // pred_check
      _
    $region27: #{tpu_custom_call.1} parent=1 // pred_check_branch
      %113 = sbr.rel (0) target = $region29
    $region28: #{tpu_custom_call.1} parent=1 // pred_region
      %115 = vsyncadd [#allocation3], 0
      %s117 = sshll.u32 [#allocation2], 4
      %s118 = int_to_ptr.vmem [resolvable:$true] %s117
      %s119 = sshll.u32 %s4, 4
      %s120 = int_to_ptr.hbm [resolvable:$true] %s119
      %122 = dma.vmem_to_hbm [thread:$0]  %s118, 32, %s120, [#allocation3]
    $region29: #{tpu_custom_call.1} parent=1 // pred_fallthru
      _
    // Predicated region
    $region30: #{tpu_custom_call.1} parent=1 // pred_check
      _
    $region31: #{tpu_custom_call.1} parent=1 // pred_check_branch
      %124 = sbr.rel (0) target = $region33
    $region32: #{tpu_custom_call.1} parent=1 // pred_region
      _
    $region33: #{tpu_custom_call.1} parent=1 // pred_fallthru
      _
    // Predicated region
    $region34: #{tpu_custom_call.1} parent=1 // pred_check
      _
    $region35: #{tpu_custom_call.1} parent=1 // pred_check_branch
      %126 = sbr.rel (0) target = $region37
    $region36: #{tpu_custom_call.1} parent=1 // pred_region
      %128 = dma.done [#allocation3], 32
    $region37: #{tpu_custom_call.1} parent=1 // pred_fallthru
      _
    // Predicated region
    $region38: #{tpu_custom_call.1} parent=1 // pred_check
      _
    $region39: #{tpu_custom_call.1} parent=1 // pred_check_branch
      %130 = sbr.rel (0) target = $region41
    $region40: #{tpu_custom_call.1} parent=1 // pred_region
      _
    $region41: #{tpu_custom_call.1} parent=1 // pred_fallthru
      _
    %131 = vsyncpa [#allocation3], 1

</llo_original>
